<compile_context>
chip_gen: v5e
topology: v5e:2x2
jax: 0.10.0
libtpu: 0.0.40
codegen_flags: <defaults>
</compile_context>

<pallas_src>
import jax
import jax.numpy as jnp
from jax.experimental import pallas as pl
from jax.experimental.pallas import tpu as pltpu

LATENT_DIM = 50
IN_DIM = 344
ENC_DIMS = [(IN_DIM, 200), (200, 100), (100, LATENT_DIM)]
DEC_DIMS = [(LATENT_DIM, 100), (100, 200), (200, IN_DIM)]

# Lane-padding map: every feature dim -> multiple of 128.
PAD = {IN_DIM: 384, 200: 256, 100: 128, LATENT_DIM: 128}

# Sum of padded fin*fout over all six matmuls (for the cost estimate).
_PADDED_MACS = sum(PAD[fi] * PAD[fo] for fi, fo in (ENC_DIMS + DEC_DIMS))


def _round_up(n, m):
    return ((n + m - 1) // m) * m


def _ae_prior_kernel(x_ref,
                     w1, b1, w2, b2, w3, b3,      # encoder params (padded)
                     w4, b4, w5, b5, w6, b6,      # decoder params (padded)
                     enc_ref, dec_ref):
    """Whole encoder+decoder MLP fused; one batch tile per grid step."""
    x = x_ref[...]

    # ---- encoder ----
    h = jnp.dot(x, w1[...], preferred_element_type=jnp.float32) + b1[...]
    h = jnp.maximum(h, 0.0)                       # Dropout -> identity (eval), ReLU
    h = jnp.dot(h, w2[...], preferred_element_type=jnp.float32) + b2[...]
    h = jnp.maximum(h, 0.0)
    enc = jnp.dot(h, w3[...], preferred_element_type=jnp.float32) + b3[...]
    enc_ref[...] = enc.astype(enc_ref.dtype)

    # ---- decoder ----
    h = jnp.dot(enc, w4[...], preferred_element_type=jnp.float32) + b4[...]
    h = jnp.maximum(h, 0.0)
    h = jnp.dot(h, w5[...], preferred_element_type=jnp.float32) + b5[...]
    h = jnp.maximum(h, 0.0)
    dec = jnp.dot(h, w6[...], preferred_element_type=jnp.float32) + b6[...]
    dec_ref[...] = dec.astype(dec_ref.dtype)


def _pad_params(params):
    """Zero-pad weights (in,out) and biases (1,out) to lane-aligned shapes."""
    padded = []
    for w, b in zip(params[::2], params[1::2]):
        fin, fout = w.shape
        fin_p, fout_p = PAD[fin], PAD[fout]
        w_p = jnp.zeros((fin_p, fout_p), jnp.float32).at[:fin, :fout].set(w)
        b_p = jnp.zeros((1, fout_p), jnp.float32).at[:, :fout].set(
            b.reshape(1, fout))
        padded.extend([w_p, b_p])
    return padded


def ae_prior_forward(x, params, *, max_batch_tile=512):
    """params: flat list [w1, b1, ..., w6, b6]; returns (enc, dec)."""
    B = x.shape[0]
    in_p = PAD[IN_DIM]        # 384
    lat_p = PAD[LATENT_DIM]   # 128

    # Batch tile: small batches stay a single (sublane-aligned) tile; large
    # batches are tiled at 512 rows so double-buffered DMA fits every
    # generation's scoped-VMEM default while params stay resident.
    tb = min(max_batch_tile, _round_up(B, 8))
    b_pad = _round_up(B, tb)
    grid = (b_pad // tb,)

    x_p = jnp.zeros((b_pad, in_p), jnp.float32).at[:B, :IN_DIM].set(
        x.astype(jnp.float32))
    padded_params = _pad_params(params)

    # Weights/biases: full-array blocks with a constant index_map -> the same
    # block index every grid step, so Pallas keeps them VMEM-resident.
    param_specs = [pl.BlockSpec(p.shape, lambda i: (0, 0))
                   for p in padded_params]

    flops = 2 * b_pad * _PADDED_MACS
    bytes_accessed = 4 * (x_p.size + b_pad * lat_p + b_pad * in_p
                          + sum(p.size for p in padded_params))

    enc_p, dec_p = pl.pallas_call(
        _ae_prior_kernel,
        out_shape=(
            jax.ShapeDtypeStruct((b_pad, lat_p), jnp.float32),
            jax.ShapeDtypeStruct((b_pad, in_p), jnp.float32),
        ),
        grid=grid,
        in_specs=[pl.BlockSpec((tb, in_p), lambda i: (i, 0))] + param_specs,
        out_specs=(
            pl.BlockSpec((tb, lat_p), lambda i: (i, 0)),
            pl.BlockSpec((tb, in_p), lambda i: (i, 0)),
        ),
        compiler_params=pltpu.CompilerParams(
            dimension_semantics=("parallel",)),
        cost_estimate=pl.CostEstimate(
            flops=flops, transcendentals=0, bytes_accessed=bytes_accessed),
    )(x_p, *padded_params)

    return enc_p[:B, :LATENT_DIM], dec_p[:B, :IN_DIM]


def init_params(key):
    """Deterministic PyTorch-style init: U(-1/sqrt(fan_in), 1/sqrt(fan_in))."""
    params = []
    dims = ENC_DIMS + DEC_DIMS
    keys = jax.random.split(key, 2 * len(dims))
    for i, (fan_in, fan_out) in enumerate(dims):
        bound = 1.0 / (fan_in ** 0.5)
        w = jax.random.uniform(keys[2 * i], (fan_in, fan_out),
                               minval=-bound, maxval=bound, dtype=jnp.float32)
        b = jax.random.uniform(keys[2 * i + 1], (1, fan_out),
                               minval=-bound, maxval=bound, dtype=jnp.float32)
        params.extend([w, b])
    return params


def reference_forward(x, params):
    """Plain-JAX reference for sanity check."""
    w1, b1, w2, b2, w3, b3, w4, b4, w5, b5, w6, b6 = params
    h = jnp.maximum(x @ w1 + b1, 0.0)
    h = jnp.maximum(h @ w2 + b2, 0.0)
    enc = h @ w3 + b3
    h = jnp.maximum(enc @ w4 + b4, 0.0)
    h = jnp.maximum(h @ w5 + b5, 0.0)
    dec = h @ w6 + b6
    return enc, dec


if __name__ == "__main__":
    key = jax.random.PRNGKey(0)
    k_x, k_p = jax.random.split(key)

    B = 8  # small batch
    x = jax.random.normal(k_x, (B, IN_DIM), dtype=jnp.float32)
    params = init_params(k_p)

    enc, dec = ae_prior_forward(x, params)
    enc = jax.block_until_ready(enc)
    dec = jax.block_until_ready(dec)

    # sanity check against plain JAX
    enc_ref, dec_ref = reference_forward(x, params)
    assert enc.shape == (B, LATENT_DIM) and dec.shape == (B, IN_DIM)
    assert jnp.allclose(enc, enc_ref, atol=1e-4, rtol=1e-4)
    assert jnp.allclose(dec, dec_ref, atol=1e-4, rtol=1e-4)

    print("KERNEL_OK")
</pallas_src>

<mosaic_0001>
module attributes {stable_mosaic.version = 11 : i64} {
  func.func @_ae_prior_kernel(%arg0: i32, %arg1: memref<8x384xf32, #tpu.memory_space<vmem>>, %arg2: memref<384x256xf32, #tpu.memory_space<vmem>>, %arg3: memref<1x256xf32, #tpu.memory_space<vmem>>, %arg4: memref<256x128xf32, #tpu.memory_space<vmem>>, %arg5: memref<1x128xf32, #tpu.memory_space<vmem>>, %arg6: memref<128x128xf32, #tpu.memory_space<vmem>>, %arg7: memref<1x128xf32, #tpu.memory_space<vmem>>, %arg8: memref<128x128xf32, #tpu.memory_space<vmem>>, %arg9: memref<1x128xf32, #tpu.memory_space<vmem>>, %arg10: memref<128x256xf32, #tpu.memory_space<vmem>>, %arg11: memref<1x256xf32, #tpu.memory_space<vmem>>, %arg12: memref<256x384xf32, #tpu.memory_space<vmem>>, %arg13: memref<1x384xf32, #tpu.memory_space<vmem>>, %arg14: memref<8x128xf32, #tpu.memory_space<vmem>>, %arg15: memref<8x384xf32, #tpu.memory_space<vmem>>) attributes {dimension_semantics = [#tpu.dimension_semantics<parallel>], iteration_bounds = array<i64: 1>, scalar_prefetch = 0 : i64, scratch_operands = 0 : i64, tpu.core_type = #tpu.core_type<tc>, window_params = [{transform_indices = @transform_0, window_bounds = array<i64: 8, 384>}, {pipeline_mode = #tpu.pipeline_mode<synchronous>, transform_indices = @transform_1, window_bounds = array<i64: 384, 256>}, {pipeline_mode = #tpu.pipeline_mode<synchronous>, transform_indices = @transform_2, window_bounds = array<i64: 1, 256>}, {pipeline_mode = #tpu.pipeline_mode<synchronous>, transform_indices = @transform_3, window_bounds = array<i64: 256, 128>}, {pipeline_mode = #tpu.pipeline_mode<synchronous>, transform_indices = @transform_4, window_bounds = array<i64: 1, 128>}, {pipeline_mode = #tpu.pipeline_mode<synchronous>, transform_indices = @transform_5, window_bounds = array<i64: 128, 128>}, {pipeline_mode = #tpu.pipeline_mode<synchronous>, transform_indices = @transform_6, window_bounds = array<i64: 1, 128>}, {pipeline_mode = #tpu.pipeline_mode<synchronous>, transform_indices = @transform_7, window_bounds = array<i64: 128, 128>}, {pipeline_mode = #tpu.pipeline_mode<synchronous>, transform_indices = @transform_8, window_bounds = array<i64: 1, 128>}, {pipeline_mode = #tpu.pipeline_mode<synchronous>, transform_indices = @transform_9, window_bounds = array<i64: 128, 256>}, {pipeline_mode = #tpu.pipeline_mode<synchronous>, transform_indices = @transform_10, window_bounds = array<i64: 1, 256>}, {pipeline_mode = #tpu.pipeline_mode<synchronous>, transform_indices = @transform_11, window_bounds = array<i64: 256, 384>}, {pipeline_mode = #tpu.pipeline_mode<synchronous>, transform_indices = @transform_12, window_bounds = array<i64: 1, 384>}, {transform_indices = @transform_13, window_bounds = array<i64: 8, 128>}, {transform_indices = @transform_14, window_bounds = array<i64: 8, 384>}]} {
    %c0 = arith.constant 0 : index
    %c0_0 = arith.constant 0 : index
    %0 = vector.load %arg1[%c0, %c0_0] : memref<8x384xf32, #tpu.memory_space<vmem>>, vector<8x384xf32>
    %c0_1 = arith.constant 0 : index
    %c0_2 = arith.constant 0 : index
    %1 = vector.load %arg2[%c0_1, %c0_2] : memref<384x256xf32, #tpu.memory_space<vmem>>, vector<384x256xf32>
    %cst = arith.constant dense<0.000000e+00> : vector<8x256xf32>
    %2 = tpu.matmul %0, %1, %cst {dimension_numbers = #tpu.dot_dimension_numbers<[1], [0], [0], [1], [0, 0, 1, 1], [], []>} : vector<8x384xf32>, vector<384x256xf32>, vector<8x256xf32> -> vector<8x256xf32>
    %c0_3 = arith.constant 0 : index
    %c0_4 = arith.constant 0 : index
    %3 = vector.load %arg3[%c0_3, %c0_4] : memref<1x256xf32, #tpu.memory_space<vmem>>, vector<1x256xf32>
    %4 = vector.broadcast %3 : vector<1x256xf32> to vector<8x256xf32>
    %5 = arith.addf %2, %4 : vector<8x256xf32>
    %cst_5 = arith.constant 0.000000e+00 : f32
    %6 = vector.broadcast %cst_5 : f32 to vector<8x256xf32>
    %7 = arith.maximumf %5, %6 : vector<8x256xf32>
    %c0_6 = arith.constant 0 : index
    %c0_7 = arith.constant 0 : index
    %8 = vector.load %arg4[%c0_6, %c0_7] : memref<256x128xf32, #tpu.memory_space<vmem>>, vector<256x128xf32>
    %cst_8 = arith.constant dense<0.000000e+00> : vector<8x128xf32>
    %9 = tpu.matmul %7, %8, %cst_8 {dimension_numbers = #tpu.dot_dimension_numbers<[1], [0], [0], [1], [0, 0, 1, 1], [], []>} : vector<8x256xf32>, vector<256x128xf32>, vector<8x128xf32> -> vector<8x128xf32>
    %c0_9 = arith.constant 0 : index
    %c0_10 = arith.constant 0 : index
    %10 = vector.load %arg5[%c0_9, %c0_10] : memref<1x128xf32, #tpu.memory_space<vmem>>, vector<1x128xf32>
    %11 = vector.broadcast %10 : vector<1x128xf32> to vector<8x128xf32>
    %12 = arith.addf %9, %11 : vector<8x128xf32>
    %cst_11 = arith.constant 0.000000e+00 : f32
    %13 = vector.broadcast %cst_11 : f32 to vector<8x128xf32>
    %14 = arith.maximumf %12, %13 : vector<8x128xf32>
    %c0_12 = arith.constant 0 : index
    %c0_13 = arith.constant 0 : index
    %15 = vector.load %arg6[%c0_12, %c0_13] : memref<128x128xf32, #tpu.memory_space<vmem>>, vector<128x128xf32>
    %cst_14 = arith.constant dense<0.000000e+00> : vector<8x128xf32>
    %16 = tpu.matmul %14, %15, %cst_14 {dimension_numbers = #tpu.dot_dimension_numbers<[1], [0], [0], [1], [0, 0, 1, 1], [], []>} : vector<8x128xf32>, vector<128x128xf32>, vector<8x128xf32> -> vector<8x128xf32>
    %c0_15 = arith.constant 0 : index
    %c0_16 = arith.constant 0 : index
    %17 = vector.load %arg7[%c0_15, %c0_16] : memref<1x128xf32, #tpu.memory_space<vmem>>, vector<1x128xf32>
    %18 = vector.broadcast %17 : vector<1x128xf32> to vector<8x128xf32>
    %19 = arith.addf %16, %18 : vector<8x128xf32>
    %c0_17 = arith.constant 0 : index
    %c0_18 = arith.constant 0 : index
    %20 = vector.load %arg14[%c0_17, %c0_18] : memref<8x128xf32, #tpu.memory_space<vmem>>, vector<8x128xf32>
    tpu.vector_store %arg14[%c0_17, %c0_18], %19 {strides = array<i32>} : memref<8x128xf32, #tpu.memory_space<vmem>>, vector<8x128xf32>,
    %c0_19 = arith.constant 0 : index
    %c0_20 = arith.constant 0 : index
    %21 = vector.load %arg8[%c0_19, %c0_20] : memref<128x128xf32, #tpu.memory_space<vmem>>, vector<128x128xf32>
    %cst_21 = arith.constant dense<0.000000e+00> : vector<8x128xf32>
    %22 = tpu.matmul %19, %21, %cst_21 {dimension_numbers = #tpu.dot_dimension_numbers<[1], [0], [0], [1], [0, 0, 1, 1], [], []>} : vector<8x128xf32>, vector<128x128xf32>, vector<8x128xf32> -> vector<8x128xf32>
    %c0_22 = arith.constant 0 : index
    %c0_23 = arith.constant 0 : index
    %23 = vector.load %arg9[%c0_22, %c0_23] : memref<1x128xf32, #tpu.memory_space<vmem>>, vector<1x128xf32>
    %24 = vector.broadcast %23 : vector<1x128xf32> to vector<8x128xf32>
    %25 = arith.addf %22, %24 : vector<8x128xf32>
    %cst_24 = arith.constant 0.000000e+00 : f32
    %26 = vector.broadcast %cst_24 : f32 to vector<8x128xf32>
    %27 = arith.maximumf %25, %26 : vector<8x128xf32>
    %c0_25 = arith.constant 0 : index
    %c0_26 = arith.constant 0 : index
    %28 = vector.load %arg10[%c0_25, %c0_26] : memref<128x256xf32, #tpu.memory_space<vmem>>, vector<128x256xf32>
    %cst_27 = arith.constant dense<0.000000e+00> : vector<8x256xf32>
    %29 = tpu.matmul %27, %28, %cst_27 {dimension_numbers = #tpu.dot_dimension_numbers<[1], [0], [0], [1], [0, 0, 1, 1], [], []>} : vector<8x128xf32>, vector<128x256xf32>, vector<8x256xf32> -> vector<8x256xf32>
    %c0_28 = arith.constant 0 : index
    %c0_29 = arith.constant 0 : index
    %30 = vector.load %arg11[%c0_28, %c0_29] : memref<1x256xf32, #tpu.memory_space<vmem>>, vector<1x256xf32>
    %31 = vector.broadcast %30 : vector<1x256xf32> to vector<8x256xf32>
    %32 = arith.addf %29, %31 : vector<8x256xf32>
    %cst_30 = arith.constant 0.000000e+00 : f32
    %33 = vector.broadcast %cst_30 : f32 to vector<8x256xf32>
    %34 = arith.maximumf %32, %33 : vector<8x256xf32>
    %c0_31 = arith.constant 0 : index
    %c0_32 = arith.constant 0 : index
    %35 = vector.load %arg12[%c0_31, %c0_32] : memref<256x384xf32, #tpu.memory_space<vmem>>, vector<256x384xf32>
    %cst_33 = arith.constant dense<0.000000e+00> : vector<8x384xf32>
    %36 = tpu.matmul %34, %35, %cst_33 {dimension_numbers = #tpu.dot_dimension_numbers<[1], [0], [0], [1], [0, 0, 1, 1], [], []>} : vector<8x256xf32>, vector<256x384xf32>, vector<8x384xf32> -> vector<8x384xf32>
    %c0_34 = arith.constant 0 : index
    %c0_35 = arith.constant 0 : index
    %37 = vector.load %arg13[%c0_34, %c0_35] : memref<1x384xf32, #tpu.memory_space<vmem>>, vector<1x384xf32>
    %38 = vector.broadcast %37 : vector<1x384xf32> to vector<8x384xf32>
    %39 = arith.addf %36, %38 : vector<8x384xf32>
    %c0_36 = arith.constant 0 : index
    %c0_37 = arith.constant 0 : index
    %40 = vector.load %arg15[%c0_36, %c0_37] : memref<8x384xf32, #tpu.memory_space<vmem>>, vector<8x384xf32>
    tpu.vector_store %arg15[%c0_36, %c0_37], %39 {strides = array<i32>} : memref<8x384xf32, #tpu.memory_space<vmem>>, vector<8x384xf32>,
    return
  }
  func.func @transform_0(%arg0: i32) -> (i32, i32) {
    %c0_i32 = arith.constant 0 : i32
    %c0_i32_0 = arith.constant 0 : i32
    return %arg0, %c0_i32 : i32, i32
  }
  func.func @transform_1(%arg0: i32) -> (i32, i32) {
    %c0_i32 = arith.constant 0 : i32
    %c0_i32_0 = arith.constant 0 : i32
    %c0_i32_1 = arith.constant 0 : i32
    return %c0_i32, %c0_i32_0 : i32, i32
  }
  func.func @transform_2(%arg0: i32) -> (i32, i32) {
    %c0_i32 = arith.constant 0 : i32
    %c0_i32_0 = arith.constant 0 : i32
    %c0_i32_1 = arith.constant 0 : i32
    return %c0_i32, %c0_i32_0 : i32, i32
  }
  func.func @transform_3(%arg0: i32) -> (i32, i32) {
    %c0_i32 = arith.constant 0 : i32
    %c0_i32_0 = arith.constant 0 : i32
    %c0_i32_1 = arith.constant 0 : i32
    return %c0_i32, %c0_i32_0 : i32, i32
  }
  func.func @transform_4(%arg0: i32) -> (i32, i32) {
    %c0_i32 = arith.constant 0 : i32
    %c0_i32_0 = arith.constant 0 : i32
    %c0_i32_1 = arith.constant 0 : i32
    return %c0_i32, %c0_i32_0 : i32, i32
  }
  func.func @transform_5(%arg0: i32) -> (i32, i32) {
    %c0_i32 = arith.constant 0 : i32
    %c0_i32_0 = arith.constant 0 : i32
    %c0_i32_1 = arith.constant 0 : i32
    return %c0_i32, %c0_i32_0 : i32, i32
  }
  func.func @transform_6(%arg0: i32) -> (i32, i32) {
    %c0_i32 = arith.constant 0 : i32
    %c0_i32_0 = arith.constant 0 : i32
    %c0_i32_1 = arith.constant 0 : i32
    return %c0_i32, %c0_i32_0 : i32, i32
  }
  func.func @transform_7(%arg0: i32) -> (i32, i32) {
    %c0_i32 = arith.constant 0 : i32
    %c0_i32_0 = arith.constant 0 : i32
    %c0_i32_1 = arith.constant 0 : i32
    return %c0_i32, %c0_i32_0 : i32, i32
  }
  func.func @transform_8(%arg0: i32) -> (i32, i32) {
    %c0_i32 = arith.constant 0 : i32
    %c0_i32_0 = arith.constant 0 : i32
    %c0_i32_1 = arith.constant 0 : i32
    return %c0_i32, %c0_i32_0 : i32, i32
  }
  func.func @transform_9(%arg0: i32) -> (i32, i32) {
    %c0_i32 = arith.constant 0 : i32
    %c0_i32_0 = arith.constant 0 : i32
    %c0_i32_1 = arith.constant 0 : i32
    return %c0_i32, %c0_i32_0 : i32, i32
  }
  func.func @transform_10(%arg0: i32) -> (i32, i32) {
    %c0_i32 = arith.constant 0 : i32
    %c0_i32_0 = arith.constant 0 : i32
    %c0_i32_1 = arith.constant 0 : i32
    return %c0_i32, %c0_i32_0 : i32, i32
  }
  func.func @transform_11(%arg0: i32) -> (i32, i32) {
    %c0_i32 = arith.constant 0 : i32
    %c0_i32_0 = arith.constant 0 : i32
    %c0_i32_1 = arith.constant 0 : i32
    return %c0_i32, %c0_i32_0 : i32, i32
  }
  func.func @transform_12(%arg0: i32) -> (i32, i32) {
    %c0_i32 = arith.constant 0 : i32
    %c0_i32_0 = arith.constant 0 : i32
    %c0_i32_1 = arith.constant 0 : i32
    return %c0_i32, %c0_i32_0 : i32, i32
  }
  func.func @transform_13(%arg0: i32) -> (i32, i32) {
    %c0_i32 = arith.constant 0 : i32
    %c0_i32_0 = arith.constant 0 : i32
    return %arg0, %c0_i32 : i32, i32
  }
  func.func @transform_14(%arg0: i32) -> (i32, i32) {
    %c0_i32 = arith.constant 0 : i32
    %c0_i32_0 = arith.constant 0 : i32
    return %arg0, %c0_i32 : i32, i32
  }
}

</mosaic_0001>

<llo_original>
// kernel: tpu_custom_call.1
$region0: #{tpu_custom_call.1}
  #allocation0 [shape = 'u32[]', space=smem, size = 0x4, offset = 0x4, fixed_abs, tag = 'smem constant byte address 0x4 - core index']
  #allocation1 [shape = 'u32[72,128]{1,0:T(1,128)}', space=vmem, size = 0x9000, scoped, tag = 'internal scratch']
  %s0 = inlined_call_operand.hbm [shape: f32[8,384], index: 0, kind: input, shape index: {}]
  %s1 = inlined_call_operand.hbm [shape: f32[384,256], index: 1, kind: input, shape index: {}]
  %s2 = inlined_call_operand.hbm [shape: f32[1,256], index: 2, kind: input, shape index: {}]
  %s3 = inlined_call_operand.hbm [shape: f32[256,128], index: 3, kind: input, shape index: {}]
  %s4 = inlined_call_operand.hbm [shape: f32[1,128], index: 4, kind: input, shape index: {}]
  %s5 = inlined_call_operand.hbm [shape: f32[128,128], index: 5, kind: input, shape index: {}]
  %s6 = inlined_call_operand.hbm [shape: f32[1,128], index: 6, kind: input, shape index: {}]
  %s7 = inlined_call_operand.hbm [shape: f32[128,128], index: 7, kind: input, shape index: {}]
  %s8 = inlined_call_operand.vmem [shape: f32[1,128], index: 8, kind: input, shape index: {}]
  %s9 = inlined_call_operand.hbm [shape: f32[128,256], index: 9, kind: input, shape index: {}]
  %s10 = inlined_call_operand.vmem [shape: f32[1,256], index: 10, kind: input, shape index: {}]
  %s11 = inlined_call_operand.hbm [shape: f32[256,384], index: 11, kind: input, shape index: {}]
  %s12 = inlined_call_operand.vmem [shape: f32[1,384], index: 12, kind: input, shape index: {}]
  %s13 = inlined_call_operand.hbm [shape: f32[8,128], index: 13, kind: output, shape index: {0}]
  %s14 = inlined_call_operand.hbm [shape: f32[8,384], index: 14, kind: output, shape index: {1}]
  %15 = xla_tuple %s13, %s14
  %s16 = sld [smem:[#allocation0]]
  $region110: #{tpu_custom_call.1} parent=0
    _
  %s18 = ssub.s32 1, %s16
  %s19 = scalar_select 0, %s18, %s16
  $region1: #{tpu_custom_call.1} parent=0
    #allocation2 [shape = 'u8[12288]{0}', space=vmem, size = 0x3000, scoped, tag = 'input window, operand 0, single buffered']
    #allocation3 [shape = 's32[1]{0}', space=sflag, size = 0x4, scoped, tag = 'scoped memory for tpu_custom_call.1']
    #allocation4 [shape = 's32[1]{0}', space=sflag, size = 0x4, scoped, tag = 'scoped memory for tpu_custom_call.1']
    #allocation5 [shape = 'u8[393216]{0}', space=vmem, size = 0x60000, scoped, tag = 'input window, operand 1, single buffered']
    #allocation6 [shape = 's32[1]{0}', space=sflag, size = 0x4, scoped, tag = 'scoped memory for tpu_custom_call.1']
    #allocation7 [shape = 'u8[1024]{0}', space=vmem, size = 0x400, scoped, tag = 'input window, operand 2, single buffered']
    #allocation8 [shape = 'u8[131072]{0}', space=vmem, size = 0x20000, scoped, tag = 'input window, operand 3, single buffered']
    #allocation9 [shape = 's32[1]{0}', space=sflag, size = 0x4, scoped, tag = 'scoped memory for tpu_custom_call.1']
    #allocation10 [shape = 'u8[512]{0}', space=vmem, size = 0x400, scoped, tag = 'input window, operand 4, single buffered']
    #allocation11 [shape = 'u8[65536]{0}', space=vmem, size = 0x10000, scoped, tag = 'input window, operand 5, single buffered']
    #allocation12 [shape = 's32[1]{0}', space=sflag, size = 0x4, scoped, tag = 'scoped memory for tpu_custom_call.1']
    #allocation13 [shape = 'u8[512]{0}', space=vmem, size = 0x400, scoped, tag = 'input window, operand 6, single buffered']
    #allocation14 [shape = 'u8[65536]{0}', space=vmem, size = 0x10000, scoped, tag = 'input window, operand 7, single buffered']
    #allocation15 [shape = 's32[1]{0}', space=sflag, size = 0x4, scoped, tag = 'scoped memory for tpu_custom_call.1']
    #allocation16 [shape = 'u8[131072]{0}', space=vmem, size = 0x20000, scoped, tag = 'input window, operand 9, single buffered']
    #allocation17 [shape = 'u8[393216]{0}', space=vmem, size = 0x60000, scoped, tag = 'input window, operand 11, single buffered']
    #allocation18 [shape = 's32[1]{0}', space=sflag, size = 0x4, scoped, tag = 'scoped memory for tpu_custom_call.1']
    #allocation19 [shape = 'u8[4096]{0}', space=vmem, size = 0x1000, scoped, tag = 'output window, operand 0, single buffered']
    #allocation20 [shape = 'u8[12288]{0}', space=vmem, size = 0x3000, scoped, tag = 'output window, operand 1, single buffered']
    #allocation21 [shape = 's32[1]{0}', space=sflag, size = 0x4, scoped, tag = 'scoped memory for tpu_custom_call.1']
    %20 = vsyncpa [#allocation3], 0
    %21 = vsyncpa [#allocation6], 0
    %22 = vsyncpa [#allocation9], 0
    %23 = vsyncpa [#allocation12], 0
    %24 = vsyncpa [#allocation15], 0
    %25 = vsyncpa [#allocation18], 0
    %26 = vsyncpa [#allocation4], 0
    %27 = vsyncpa [#allocation21], 0
    // Predicated region
    $region2: #{tpu_custom_call.1} parent=1 // pred_check
      _
    $region3: #{tpu_custom_call.1} parent=1 // pred_check_branch
      %29 = sbr.rel (0) target = $region5
    $region4: #{tpu_custom_call.1} parent=1 // pred_region
      %31 = vsyncadd [#allocation3], 0
      %s33 = sshll.u32 %s0, 4
      %s34 = int_to_ptr.hbm [resolvable:$true] %s33
      %s35 = sshll.u32 [#allocation2], 4
      %s36 = int_to_ptr.vmem [resolvable:$true] %s35
      %38 = dma.hbm_to_vmem [thread:$0]  %s34, 384, %s36, [#allocation3]
    $region5: #{tpu_custom_call.1} parent=1 // pred_fallthru
      _
    // Predicated region
    $region6: #{tpu_custom_call.1} parent=1 // pred_check
      _
    $region7: #{tpu_custom_call.1} parent=1 // pred_check_branch
      %40 = sbr.rel (0) target = $region9
    $region8: #{tpu_custom_call.1} parent=1 // pred_region
      %42 = vsyncadd [#allocation6], 0
      %s43 = sshll.u32 %s1, 4
      %s44 = int_to_ptr.hbm [resolvable:$true] %s43
      %s45 = sshll.u32 [#allocation5], 4
      %s46 = int_to_ptr.vmem [resolvable:$true] %s45
      %51 = dma.hbm_to_vmem [thread:$0]  %s44, 12288, %s46, [#allocation6], 256, 256, 16
    $region9: #{tpu_custom_call.1} parent=1 // pred_fallthru
      _
    // Predicated region
    $region10: #{tpu_custom_call.1} parent=1 // pred_check
      _
    $region11: #{tpu_custom_call.1} parent=1 // pred_check_branch
      %53 = sbr.rel (0) target = $region13
    $region12: #{tpu_custom_call.1} parent=1 // pred_region
      %55 = vsyncadd [#allocation6], 0
      %s57 = sshll.u32 %s2, 4
      %s58 = int_to_ptr.hbm [resolvable:$true] %s57
      %s59 = sshll.u32 [#allocation7], 4
      %s60 = int_to_ptr.vmem [resolvable:$true] %s59
      %62 = dma.hbm_to_vmem [thread:$0]  %s58, 32, %s60, [#allocation6]
    $region13: #{tpu_custom_call.1} parent=1 // pred_fallthru
      _
    // Predicated region
    $region14: #{tpu_custom_call.1} parent=1 // pred_check
      _
    $region15: #{tpu_custom_call.1} parent=1 // pred_check_branch
      %64 = sbr.rel (0) target = $region17
    $region16: #{tpu_custom_call.1} parent=1 // pred_region
      %66 = vsyncadd [#allocation9], 0
      %s67 = sshll.u32 %s3, 4
      %s68 = int_to_ptr.hbm [resolvable:$true] %s67
      %s69 = sshll.u32 [#allocation8], 4
      %s70 = int_to_ptr.vmem [resolvable:$true] %s69
      %75 = dma.hbm_to_vmem [thread:$0]  %s68, 4096, %s70, [#allocation9], 128, 128, 8
    $region17: #{tpu_custom_call.1} parent=1 // pred_fallthru
      _
    // Predicated region
    $region18: #{tpu_custom_call.1} parent=1 // pred_check
      _
    $region19: #{tpu_custom_call.1} parent=1 // pred_check_branch
      %77 = sbr.rel (0) target = $region21
    $region20: #{tpu_custom_call.1} parent=1 // pred_region
      %79 = vsyncadd [#allocation9], 0
      %s81 = sshll.u32 %s4, 4
      %s82 = int_to_ptr.hbm [resolvable:$true] %s81
      %s83 = sshll.u32 [#allocation10], 4
      %s84 = int_to_ptr.vmem [resolvable:$true] %s83
      %86 = dma.hbm_to_vmem [thread:$0]  %s82, 16, %s84, [#allocation9]
    $region21: #{tpu_custom_call.1} parent=1 // pred_fallthru
      _
    // Predicated region
    $region22: #{tpu_custom_call.1} parent=1 // pred_check
      _
    $region23: #{tpu_custom_call.1} parent=1 // pred_check_branch
      %88 = sbr.rel (0) target = $region25
    $region24: #{tpu_custom_call.1} parent=1 // pred_region
      %90 = vsyncadd [#allocation12], 0
      %s91 = sshll.u32 %s5, 4
      %s92 = int_to_ptr.hbm [resolvable:$true] %s91
      %s93 = sshll.u32 [#allocation11], 4
      %s94 = int_to_ptr.vmem [resolvable:$true] %s93
      %99 = dma.hbm_to_vmem [thread:$0]  %s92, 2048, %s94, [#allocation12], 128, 128, 8
    $region25: #{tpu_custom_call.1} parent=1 // pred_fallthru
      _
    // Predicated region
    $region26: #{tpu_custom_call.1} parent=1 // pred_check
      _
    $region27: #{tpu_custom_call.1} parent=1 // pred_check_branch
      %101 = sbr.rel (0) target = $region29
    $region28: #{tpu_custom_call.1} parent=1 // pred_region
      %103 = vsyncadd [#allocation12], 0
      %s105 = sshll.u32 %s6, 4
      %s106 = int_to_ptr.hbm [resolvable:$true] %s105
      %s107 = sshll.u32 [#allocation13], 4
      %s108 = int_to_ptr.vmem [resolvable:$true] %s107
      %110 = dma.hbm_to_vmem [thread:$0]  %s106, 16, %s108, [#allocation12]
    $region29: #{tpu_custom_call.1} parent=1 // pred_fallthru
      _
    // Predicated region
    $region30: #{tpu_custom_call.1} parent=1 // pred_check
      _
    $region31: #{tpu_custom_call.1} parent=1 // pred_check_branch
      %112 = sbr.rel (0) target = $region33
    $region32: #{tpu_custom_call.1} parent=1 // pred_region
      %114 = vsyncadd [#allocation15], 0
      %s115 = sshll.u32 %s7, 4
      %s116 = int_to_ptr.hbm [resolvable:$true] %s115
      %s117 = sshll.u32 [#allocation14], 4
      %s118 = int_to_ptr.vmem [resolvable:$true] %s117
      %123 = dma.hbm_to_vmem [thread:$0]  %s116, 2048, %s118, [#allocation15], 128, 128, 8
    $region33: #{tpu_custom_call.1} parent=1 // pred_fallthru
      _
    // Predicated region
    $region34: #{tpu_custom_call.1} parent=1 // pred_check
      _
    $region35: #{tpu_custom_call.1} parent=1 // pred_check_branch
      %125 = sbr.rel (0) target = $region37
    $region36: #{tpu_custom_call.1} parent=1 // pred_region
      _
    $region37: #{tpu_custom_call.1} parent=1 // pred_fallthru
      _
    // Predicated region
    $region38: #{tpu_custom_call.1} parent=1 // pred_check
      _
    $region39: #{tpu_custom_call.1} parent=1 // pred_check_branch
      %127 = sbr.rel (0) target = $region41
    $region40: #{tpu_custom_call.1} parent=1 // pred_region
      %129 = vsyncadd [#allocation15], 0
      %s130 = sshll.u32 %s9, 4
      %s131 = int_to_ptr.hbm [resolvable:$true] %s130
      %s132 = sshll.u32 [#allocation16], 4
      %s133 = int_to_ptr.vmem [resolvable:$true] %s132
      %138 = dma.hbm_to_vmem [thread:$0]  %s131, 4096, %s133, [#allocation15], 256, 256, 16
    $region41: #{tpu_custom_call.1} parent=1 // pred_fallthru
      _
    // Predicated region
    $region42: #{tpu_custom_call.1} parent=1 // pred_check
      _
    $region43: #{tpu_custom_call.1} parent=1 // pred_check_branch
      %140 = sbr.rel (0) target = $region45
    $region44: #{tpu_custom_call.1} parent=1 // pred_region
      _
    $region45: #{tpu_custom_call.1} parent=1 // pred_fallthru
      _
    // Predicated region
    $region46: #{tpu_custom_call.1} parent=1 // pred_check
      _
    $region47: #{tpu_custom_call.1} parent=1 // pred_check_branch
      %142 = sbr.rel (0) target = $region49
    $region48: #{tpu_custom_call.1} parent=1 // pred_region
      %144 = vsyncadd [#allocation18], 0
      %s145 = sshll.u32 %s11, 4
      %s146 = int_to_ptr.hbm [resolvable:$true] %s145
      %s147 = sshll.u32 [#allocation17], 4
      %s148 = int_to_ptr.vmem [resolvable:$true] %s147
      %153 = dma.hbm_to_vmem [thread:$0]  %s146, 12288, %s148, [#allocation18], 384, 384, 24
    $region49: #{tpu_custom_call.1} parent=1 // pred_fallthru
      _
    // Predicated region
    $region50: #{tpu_custom_call.1} parent=1 // pred_check
      _
    $region51: #{tpu_custom_call.1} parent=1 // pred_check_branch
      %155 = sbr.rel (0) target = $region53
    $region52: #{tpu_custom_call.1} parent=1 // pred_region
      _
    $region53: #{tpu_custom_call.1} parent=1 // pred_fallthru
      _
    // Predicated region
    $region54: #{tpu_custom_call.1} parent=1 // pred_check
      _
    $region55: #{tpu_custom_call.1} parent=1 // pred_check_branch
      %157 = sbr.rel (0) target = $region57
    $region56: #{tpu_custom_call.1} parent=1 // pred_region
      %159 = dma.done [#allocation3], 384
    $region57: #{tpu_custom_call.1} parent=1 // pred_fallthru
      _
    // Predicated region
    $region58: #{tpu_custom_call.1} parent=1 // pred_check
      _
    $region59: #{tpu_custom_call.1} parent=1 // pred_check_branch
      %161 = sbr.rel (0) target = $region61
    $region60: #{tpu_custom_call.1} parent=1 // pred_region
      %163 = dma.done [#allocation6], 12288
    $region61: #{tpu_custom_call.1} parent=1 // pred_fallthru
      _
    // Predicated region
    $region62: #{tpu_custom_call.1} parent=1 // pred_check
      _
    $region63: #{tpu_custom_call.1} parent=1 // pred_check_branch
      %165 = sbr.rel (0) target = $region65
    $region64: #{tpu_custom_call.1} parent=1 // pred_region
      %167 = dma.done [#allocation6], 32
    $region65: #{tpu_custom_call.1} parent=1 // pred_fallthru
      _
    // Predicated region
    $region66: #{tpu_custom_call.1} parent=1 // pred_check
      _
    $region67: #{tpu_custom_call.1} parent=1 // pred_check_branch
      %169 = sbr.rel (0) target = $region69
    $region68: #{tpu_custom_call.1} parent=1 // pred_region
      %171 = dma.done [#allocation9], 4096
    $region69: #{tpu_custom_call.1} parent=1 // pred_fallthru
      _
    // Predicated region
    $region70: #{tpu_custom_call.1} parent=1 // pred_check
      _
    $region71: #{tpu_custom_call.1} parent=1 // pred_check_branch
      %173 = sbr.rel (0) target = $region73
    $region72: #{tpu_custom_call.1} parent=1 // pred_region
      %175 = dma.done [#allocation9], 16
    $region73: #{tpu_custom_call.1} parent=1 // pred_fallthru
      _
    // Predicated region
    $region74: #{tpu_custom_call.1} parent=1 // pred_check
      _
    $region75: #{tpu_custom_call.1} parent=1 // pred_check_branch
      %177 = sbr.rel (0) target = $region77
    $region76: #{tpu_custom_call.1} parent=1 // pred_region
      %179 = dma.done [#allocation12], 2048
    $region77: #{tpu_custom_call.1} parent=1 // pred_fallthru
      _
    // Predicated region
    $region78: #{tpu_custom_call.1} parent=1 // pred_check
      _
    $region79: #{tpu_custom_call.1} parent=1 // pred_check_branch
      %181 = sbr.rel (0) target = $region81
    $region80: #{tpu_custom_call.1} parent=1 // pred_region
      %183 = dma.done [#allocation12], 16
    $region81: #{tpu_custom_call.1} parent=1 // pred_fallthru
      _
    // Predicated region
    $region82: #{tpu_custom_call.1} parent=1 // pred_check
      _
    $region83: #{tpu_custom_call.1} parent=1 // pred_check_branch
      %185 = sbr.rel (0) target = $region85
    $region84: #{tpu_custom_call.1} parent=1 // pred_region
      %187 = dma.done [#allocation15], 2048
    $region85: #{tpu_custom_call.1} parent=1 // pred_fallthru
      _
    // Predicated region
    $region86: #{tpu_custom_call.1} parent=1 // pred_check
      _
    $region87: #{tpu_custom_call.1} parent=1 // pred_check_branch
      %189 = sbr.rel (0) target = $region89
    $region88: #{tpu_custom_call.1} parent=1 // pred_region
      %191 = dma.done [#allocation15], 4096
    $region89: #{tpu_custom_call.1} parent=1 // pred_fallthru
      _
    // Predicated region
    $region90: #{tpu_custom_call.1} parent=1 // pred_check
      _
    $region91: #{tpu_custom_call.1} parent=1 // pred_check_branch
      %193 = sbr.rel (0) target = $region93
    $region92: #{tpu_custom_call.1} parent=1 // pred_region
      %195 = dma.done [#allocation18], 12288
    $region93: #{tpu_custom_call.1} parent=1 // pred_fallthru
      _
    %v196 = vld [vmem:[#allocation2] sm:$0xff]
    %v197 = vld [vmem:[#allocation2 + $0x8] sm:$0xff]
    %v198 = vld [vmem:[#allocation2 + $0x10] sm:$0xff]
    %v199 = vld [vmem:[#allocation5] sm:$0xff]
    %v200 = vld [vmem:[#allocation5 + $0x8] sm:$0xff]
    %v201 = vld [vmem:[#allocation5 + $0x10] sm:$0xff]
    %v202 = vld [vmem:[#allocation5 + $0x18] sm:$0xff]
    %v203 = vld [vmem:[#allocation5 + $0x20] sm:$0xff]
    %v204 = vld [vmem:[#allocation5 + $0x28] sm:$0xff]
    %v205 = vld [vmem:[#allocation5 + $0x30] sm:$0xff]
    %v206 = vld [vmem:[#allocation5 + $0x38] sm:$0xff]
    %v207 = vld [vmem:[#allocation5 + $0x40] sm:$0xff]
    %v208 = vld [vmem:[#allocation5 + $0x48] sm:$0xff]
    %v209 = vld [vmem:[#allocation5 + $0x50] sm:$0xff]
    %v210 = vld [vmem:[#allocation5 + $0x58] sm:$0xff]
    %v211 = vld [vmem:[#allocation5 + $0x60] sm:$0xff]
    %v212 = vld [vmem:[#allocation5 + $0x68] sm:$0xff]
    %v213 = vld [vmem:[#allocation5 + $0x70] sm:$0xff]
    %v214 = vld [vmem:[#allocation5 + $0x78] sm:$0xff]
    %v215 = vld [vmem:[#allocation5 + $0x80] sm:$0xff]
    %v216 = vld [vmem:[#allocation5 + $0x88] sm:$0xff]
    %v217 = vld [vmem:[#allocation5 + $0x90] sm:$0xff]
    %v218 = vld [vmem:[#allocation5 + $0x98] sm:$0xff]
    %v219 = vld [vmem:[#allocation5 + $0xa0] sm:$0xff]
    %v220 = vld [vmem:[#allocation5 + $0xa8] sm:$0xff]
    %v221 = vld [vmem:[#allocation5 + $0xb0] sm:$0xff]
    %v222 = vld [vmem:[#allocation5 + $0xb8] sm:$0xff]
    %v223 = vld [vmem:[#allocation5 + $0xc0] sm:$0xff]
    %v224 = vld [vmem:[#allocation5 + $0xc8] sm:$0xff]
    %v225 = vld [vmem:[#allocation5 + $0xd0] sm:$0xff]
    %v226 = vld [vmem:[#allocation5 + $0xd8] sm:$0xff]
    %v227 = vld [vmem:[#allocation5 + $0xe0] sm:$0xff]
    %v228 = vld [vmem:[#allocation5 + $0xe8] sm:$0xff]
    %v229 = vld [vmem:[#allocation5 + $0xf0] sm:$0xff]
    %v230 = vld [vmem:[#allocation5 + $0xf8] sm:$0xff]
    %v231 = vld [vmem:[#allocation5 + $0x100] sm:$0xff]
    %v232 = vld [vmem:[#allocation5 + $0x108] sm:$0xff]
    %v233 = vld [vmem:[#allocation5 + $0x110] sm:$0xff]
    %v234 = vld [vmem:[#allocation5 + $0x118] sm:$0xff]
    %v235 = vld [vmem:[#allocation5 + $0x120] sm:$0xff]
    %v236 = vld [vmem:[#allocation5 + $0x128] sm:$0xff]
    %v237 = vld [vmem:[#allocation5 + $0x130] sm:$0xff]
    %v238 = vld [vmem:[#allocation5 + $0x138] sm:$0xff]
    %v239 = vld [vmem:[#allocation5 + $0x140] sm:$0xff]
    %v240 = vld [vmem:[#allocation5 + $0x148] sm:$0xff]
    %v241 = vld [vmem:[#allocation5 + $0x150] sm:$0xff]
    %v242 = vld [vmem:[#allocation5 + $0x158] sm:$0xff]
    %v243 = vld [vmem:[#allocation5 + $0x160] sm:$0xff]
    %v244 = vld [vmem:[#allocation5 + $0x168] sm:$0xff]
    %v245 = vld [vmem:[#allocation5 + $0x170] sm:$0xff]
    %v246 = vld [vmem:[#allocation5 + $0x178] sm:$0xff]
    %v247 = vld [vmem:[#allocation5 + $0x180] sm:$0xff]
    %v248 = vld [vmem:[#allocation5 + $0x188] sm:$0xff]
    %v249 = vld [vmem:[#allocation5 + $0x190] sm:$0xff]
    %v250 = vld [vmem:[#allocation5 + $0x198] sm:$0xff]
    %v251 = vld [vmem:[#allocation5 + $0x1a0] sm:$0xff]
    %v252 = vld [vmem:[#allocation5 + $0x1a8] sm:$0xff]
    %v253 = vld [vmem:[#allocation5 + $0x1b0] sm:$0xff]
    %v254 = vld [vmem:[#allocation5 + $0x1b8] sm:$0xff]
    %v255 = vld [vmem:[#allocation5 + $0x1c0] sm:$0xff]
    %v256 = vld [vmem:[#allocation5 + $0x1c8] sm:$0xff]
    %v257 = vld [vmem:[#allocation5 + $0x1d0] sm:$0xff]
    %v258 = vld [vmem:[#allocation5 + $0x1d8] sm:$0xff]
    %v259 = vld [vmem:[#allocation5 + $0x1e0] sm:$0xff]
    %v260 = vld [vmem:[#allocation5 + $0x1e8] sm:$0xff]
    %v261 = vld [vmem:[#allocation5 + $0x1f0] sm:$0xff]
    %v262 = vld [vmem:[#allocation5 + $0x1f8] sm:$0xff]
    %v263 = vld [vmem:[#allocation5 + $0x200] sm:$0xff]
    %v264 = vld [vmem:[#allocation5 + $0x208] sm:$0xff]
    %v265 = vld [vmem:[#allocation5 + $0x210] sm:$0xff]
    %v266 = vld [vmem:[#allocation5 + $0x218] sm:$0xff]
    %v267 = vld [vmem:[#allocation5 + $0x220] sm:$0xff]
    %v268 = vld [vmem:[#allocation5 + $0x228] sm:$0xff]
    %v269 = vld [vmem:[#allocation5 + $0x230] sm:$0xff]
    %v270 = vld [vmem:[#allocation5 + $0x238] sm:$0xff]
    %v271 = vld [vmem:[#allocation5 + $0x240] sm:$0xff]
    %v272 = vld [vmem:[#allocation5 + $0x248] sm:$0xff]
    %v273 = vld [vmem:[#allocation5 + $0x250] sm:$0xff]
    %v274 = vld [vmem:[#allocation5 + $0x258] sm:$0xff]
    %v275 = vld [vmem:[#allocation5 + $0x260] sm:$0xff]
    %v276 = vld [vmem:[#allocation5 + $0x268] sm:$0xff]
    %v277 = vld [vmem:[#allocation5 + $0x270] sm:$0xff]
    %v278 = vld [vmem:[#allocation5 + $0x278] sm:$0xff]
    %v279 = vld [vmem:[#allocation5 + $0x280] sm:$0xff]
    %v280 = vld [vmem:[#allocation5 + $0x288] sm:$0xff]
    %v281 = vld [vmem:[#allocation5 + $0x290] sm:$0xff]
    %v282 = vld [vmem:[#allocation5 + $0x298] sm:$0xff]
    %v283 = vld [vmem:[#allocation5 + $0x2a0] sm:$0xff]
    %v284 = vld [vmem:[#allocation5 + $0x2a8] sm:$0xff]
    %v285 = vld [vmem:[#allocation5 + $0x2b0] sm:$0xff]
    %v286 = vld [vmem:[#allocation5 + $0x2b8] sm:$0xff]
    %v287 = vld [vmem:[#allocation5 + $0x2c0] sm:$0xff]
    %v288 = vld [vmem:[#allocation5 + $0x2c8] sm:$0xff]
    %v289 = vld [vmem:[#allocation5 + $0x2d0] sm:$0xff]
    %v290 = vld [vmem:[#allocation5 + $0x2d8] sm:$0xff]
    %v291 = vld [vmem:[#allocation5 + $0x2e0] sm:$0xff]
    %v292 = vld [vmem:[#allocation5 + $0x2e8] sm:$0xff]
    %v293 = vld [vmem:[#allocation5 + $0x2f0] sm:$0xff]
    %v294 = vld [vmem:[#allocation5 + $0x2f8] sm:$0xff]
    %v295 = vld [vmem:[#allocation7] sm:$0x3]
    %v297 = vperm.slane %v295, 0
    %v298 = vperm.slane %v295, 1
    %301 = vmatpush.msra.mxu0 %v229
    %302 = vmatpush.msra.mxu0 %v227
    %303 = vmatpush.msra.mxu0 %v225
    %304 = vmatpush.msra.mxu0 %v223
    %305 = vmatpush.msra.mxu0 %v221
    %306 = vmatpush.msra.mxu0 %v219
    %307 = vmatpush.msra.mxu0 %v217
    %308 = vmatpush.msra.mxu0 %v215
    %309 = vmatpush.msra.mxu0 %v213
    %310 = vmatpush.msra.mxu0 %v211
    %311 = vmatpush.msra.mxu0 %v209
    %312 = vmatpush.msra.mxu0 %v207
    %313 = vmatpush.msra.mxu0 %v205
    %314 = vmatpush.msra.mxu0 %v203
    %315 = vmatpush.msra.mxu0 %v201
    %316 = vmatpush.msra.mxu0 %v199
    %317 = vmatmul.f32.gmra.mxu0 %v196
    %v318 = vpop.f32.mrf.mxu0
    %v319 = vadd.f32 %v297, %v318
    %320 = vdwg.mxu0
    %321 = vmatpush.msra.mxu0 %v261
    %322 = vmatpush.msra.mxu0 %v259
    %323 = vmatpush.msra.mxu0 %v257
    %324 = vmatpush.msra.mxu0 %v255
    %325 = vmatpush.msra.mxu0 %v253
    %326 = vmatpush.msra.mxu0 %v251
    %327 = vmatpush.msra.mxu0 %v249
    %328 = vmatpush.msra.mxu0 %v247
    %329 = vmatpush.msra.mxu0 %v245
    %330 = vmatpush.msra.mxu0 %v243
    %331 = vmatpush.msra.mxu0 %v241
    %332 = vmatpush.msra.mxu0 %v239
    %333 = vmatpush.msra.mxu0 %v237
    %334 = vmatpush.msra.mxu0 %v235
    %335 = vmatpush.msra.mxu0 %v233
    %336 = vmatpush.msra.mxu0 %v231
    %337 = vmatmul.f32.gmra.mxu0 %v197
    %v338 = vpop.f32.mrf.mxu0
    %v339 = vadd.f32 %v319, %v338
    %340 = vdwg.mxu0
    %341 = vmatpush.msra.mxu0 %v293
    %342 = vmatpush.msra.mxu0 %v291
    %343 = vmatpush.msra.mxu0 %v289
    %344 = vmatpush.msra.mxu0 %v287
    %345 = vmatpush.msra.mxu0 %v285
    %346 = vmatpush.msra.mxu0 %v283
    %347 = vmatpush.msra.mxu0 %v281
    %348 = vmatpush.msra.mxu0 %v279
    %349 = vmatpush.msra.mxu0 %v277
    %350 = vmatpush.msra.mxu0 %v275
    %351 = vmatpush.msra.mxu0 %v273
    %352 = vmatpush.msra.mxu0 %v271
    %353 = vmatpush.msra.mxu0 %v269
    %354 = vmatpush.msra.mxu0 %v267
    %355 = vmatpush.msra.mxu0 %v265
    %356 = vmatpush.msra.mxu0 %v263
    %357 = vmatmul.f32.gmra.mxu0 %v198
    %v358 = vpop.f32.mrf.mxu0
    %v359 = vadd.f32 %v339, %v358
    %360 = vdwg.mxu0
    %361 = vmatpush.msra.mxu0 %v230
    %362 = vmatpush.msra.mxu0 %v228
    %363 = vmatpush.msra.mxu0 %v226
    %364 = vmatpush.msra.mxu0 %v224
    %365 = vmatpush.msra.mxu0 %v222
    %366 = vmatpush.msra.mxu0 %v220
    %367 = vmatpush.msra.mxu0 %v218
    %368 = vmatpush.msra.mxu0 %v216
    %369 = vmatpush.msra.mxu0 %v214
    %370 = vmatpush.msra.mxu0 %v212
    %371 = vmatpush.msra.mxu0 %v210
    %372 = vmatpush.msra.mxu0 %v208
    %373 = vmatpush.msra.mxu0 %v206
    %374 = vmatpush.msra.mxu0 %v204
    %375 = vmatpush.msra.mxu0 %v202
    %376 = vmatpush.msra.mxu0 %v200
    %377 = vmatmul.f32.gmra.mxu0 %v196
    %v378 = vpop.f32.mrf.mxu0
    %v379 = vadd.f32 %v298, %v378
    %380 = vdwg.mxu0
    %381 = vmatpush.msra.mxu0 %v262
    %382 = vmatpush.msra.mxu0 %v260
    %383 = vmatpush.msra.mxu0 %v258
    %384 = vmatpush.msra.mxu0 %v256
    %385 = vmatpush.msra.mxu0 %v254
    %386 = vmatpush.msra.mxu0 %v252
    %387 = vmatpush.msra.mxu0 %v250
    %388 = vmatpush.msra.mxu0 %v248
    %389 = vmatpush.msra.mxu0 %v246
    %390 = vmatpush.msra.mxu0 %v244
    %391 = vmatpush.msra.mxu0 %v242
    %392 = vmatpush.msra.mxu0 %v240
    %393 = vmatpush.msra.mxu0 %v238
    %394 = vmatpush.msra.mxu0 %v236
    %395 = vmatpush.msra.mxu0 %v234
    %396 = vmatpush.msra.mxu0 %v232
    %397 = vmatmul.f32.gmra.mxu0 %v197
    %v398 = vpop.f32.mrf.mxu0
    %v399 = vadd.f32 %v379, %v398
    %400 = vdwg.mxu0
    %401 = vmatpush.msra.mxu0 %v294
    %402 = vmatpush.msra.mxu0 %v292
    %403 = vmatpush.msra.mxu0 %v290
    %404 = vmatpush.msra.mxu0 %v288
    %405 = vmatpush.msra.mxu0 %v286
    %406 = vmatpush.msra.mxu0 %v284
    %407 = vmatpush.msra.mxu0 %v282
    %408 = vmatpush.msra.mxu0 %v280
    %409 = vmatpush.msra.mxu0 %v278
    %410 = vmatpush.msra.mxu0 %v276
    %411 = vmatpush.msra.mxu0 %v274
    %412 = vmatpush.msra.mxu0 %v272
    %413 = vmatpush.msra.mxu0 %v270
    %414 = vmatpush.msra.mxu0 %v268
    %415 = vmatpush.msra.mxu0 %v266
    %416 = vmatpush.msra.mxu0 %v264
    %417 = vmatmul.f32.gmra.mxu0 %v198
    %v418 = vpop.f32.mrf.mxu0
    %v419 = vadd.f32 %v399, %v418
    %420 = vdwg.mxu0
    %v421 = vmax.f32 %v359, 0.0
    %v422 = vmax.f32 %v419, 0.0
    %v423 = vld [vmem:[#allocation8] sm:$0xff]
    %v424 = vld [vmem:[#allocation8 + $0x8] sm:$0xff]
    %v425 = vld [vmem:[#allocation8 + $0x10] sm:$0xff]
    %v426 = vld [vmem:[#allocation8 + $0x18] sm:$0xff]
    %v427 = vld [vmem:[#allocation8 + $0x20] sm:$0xff]
    %v428 = vld [vmem:[#allocation8 + $0x28] sm:$0xff]
    %v429 = vld [vmem:[#allocation8 + $0x30] sm:$0xff]
    %v430 = vld [vmem:[#allocation8 + $0x38] sm:$0xff]
    %v431 = vld [vmem:[#allocation8 + $0x40] sm:$0xff]
    %v432 = vld [vmem:[#allocation8 + $0x48] sm:$0xff]
    %v433 = vld [vmem:[#allocation8 + $0x50] sm:$0xff]
    %v434 = vld [vmem:[#allocation8 + $0x58] sm:$0xff]
    %v435 = vld [vmem:[#allocation8 + $0x60] sm:$0xff]
    %v436 = vld [vmem:[#allocation8 + $0x68] sm:$0xff]
    %v437 = vld [vmem:[#allocation8 + $0x70] sm:$0xff]
    %v438 = vld [vmem:[#allocation8 + $0x78] sm:$0xff]
    %v439 = vld [vmem:[#allocation8 + $0x80] sm:$0xff]
    %v440 = vld [vmem:[#allocation8 + $0x88] sm:$0xff]
    %v441 = vld [vmem:[#allocation8 + $0x90] sm:$0xff]
    %v442 = vld [vmem:[#allocation8 + $0x98] sm:$0xff]
    %v443 = vld [vmem:[#allocation8 + $0xa0] sm:$0xff]
    %v444 = vld [vmem:[#allocation8 + $0xa8] sm:$0xff]
    %v445 = vld [vmem:[#allocation8 + $0xb0] sm:$0xff]
    %v446 = vld [vmem:[#allocation8 + $0xb8] sm:$0xff]
    %v447 = vld [vmem:[#allocation8 + $0xc0] sm:$0xff]
    %v448 = vld [vmem:[#allocation8 + $0xc8] sm:$0xff]
    %v449 = vld [vmem:[#allocation8 + $0xd0] sm:$0xff]
    %v450 = vld [vmem:[#allocation8 + $0xd8] sm:$0xff]
    %v451 = vld [vmem:[#allocation8 + $0xe0] sm:$0xff]
    %v452 = vld [vmem:[#allocation8 + $0xe8] sm:$0xff]
    %v453 = vld [vmem:[#allocation8 + $0xf0] sm:$0xff]
    %v454 = vld [vmem:[#allocation8 + $0xf8] sm:$0xff]
    %v455 = vld [vmem:[#allocation10] sm:$0x1]
    %v457 = vperm.slane %v455, 0
    %459 = vmatpush.msra.mxu0 %v438
    %460 = vmatpush.msra.mxu0 %v437
    %461 = vmatpush.msra.mxu0 %v436
    %462 = vmatpush.msra.mxu0 %v435
    %463 = vmatpush.msra.mxu0 %v434
    %464 = vmatpush.msra.mxu0 %v433
    %465 = vmatpush.msra.mxu0 %v432
    %466 = vmatpush.msra.mxu0 %v431
    %467 = vmatpush.msra.mxu0 %v430
    %468 = vmatpush.msra.mxu0 %v429
    %469 = vmatpush.msra.mxu0 %v428
    %470 = vmatpush.msra.mxu0 %v427
    %471 = vmatpush.msra.mxu0 %v426
    %472 = vmatpush.msra.mxu0 %v425
    %473 = vmatpush.msra.mxu0 %v424
    %474 = vmatpush.msra.mxu0 %v423
    %475 = vmatmul.f32.gmra.mxu0 %v421
    %v476 = vpop.f32.mrf.mxu0
    %v477 = vadd.f32 %v457, %v476
    %478 = vdwg.mxu0
    %479 = vmatpush.msra.mxu0 %v454
    %480 = vmatpush.msra.mxu0 %v453
    %481 = vmatpush.msra.mxu0 %v452
    %482 = vmatpush.msra.mxu0 %v451
    %483 = vmatpush.msra.mxu0 %v450
    %484 = vmatpush.msra.mxu0 %v449
    %485 = vmatpush.msra.mxu0 %v448
    %486 = vmatpush.msra.mxu0 %v447
    %487 = vmatpush.msra.mxu0 %v446
    %488 = vmatpush.msra.mxu0 %v445
    %489 = vmatpush.msra.mxu0 %v444
    %490 = vmatpush.msra.mxu0 %v443
    %491 = vmatpush.msra.mxu0 %v442
    %492 = vmatpush.msra.mxu0 %v441
    %493 = vmatpush.msra.mxu0 %v440
    %494 = vmatpush.msra.mxu0 %v439
    %495 = vmatmul.f32.gmra.mxu0 %v422
    %v496 = vpop.f32.mrf.mxu0
    %v497 = vadd.f32 %v477, %v496
    %498 = vdwg.mxu0
    %v499 = vmax.f32 %v497, 0.0
    %v500 = vld [vmem:[#allocation11] sm:$0xff]
    %v501 = vld [vmem:[#allocation11 + $0x8] sm:$0xff]
    %v502 = vld [vmem:[#allocation11 + $0x10] sm:$0xff]
    %v503 = vld [vmem:[#allocation11 + $0x18] sm:$0xff]
    %v504 = vld [vmem:[#allocation11 + $0x20] sm:$0xff]
    %v505 = vld [vmem:[#allocation11 + $0x28] sm:$0xff]
    %v506 = vld [vmem:[#allocation11 + $0x30] sm:$0xff]
    %v507 = vld [vmem:[#allocation11 + $0x38] sm:$0xff]
    %v508 = vld [vmem:[#allocation11 + $0x40] sm:$0xff]
    %v509 = vld [vmem:[#allocation11 + $0x48] sm:$0xff]
    %v510 = vld [vmem:[#allocation11 + $0x50] sm:$0xff]
    %v511 = vld [vmem:[#allocation11 + $0x58] sm:$0xff]
    %v512 = vld [vmem:[#allocation11 + $0x60] sm:$0xff]
    %v513 = vld [vmem:[#allocation11 + $0x68] sm:$0xff]
    %v514 = vld [vmem:[#allocation11 + $0x70] sm:$0xff]
    %v515 = vld [vmem:[#allocation11 + $0x78] sm:$0xff]
    %v516 = vld [vmem:[#allocation13] sm:$0x1]
    %v518 = vperm.slane %v516, 0
    %520 = vmatpush.msra.mxu0 %v515
    %521 = vmatpush.msra.mxu0 %v514
    %522 = vmatpush.msra.mxu0 %v513
    %523 = vmatpush.msra.mxu0 %v512
    %524 = vmatpush.msra.mxu0 %v511
    %525 = vmatpush.msra.mxu0 %v510
    %526 = vmatpush.msra.mxu0 %v509
    %527 = vmatpush.msra.mxu0 %v508
    %528 = vmatpush.msra.mxu0 %v507
    %529 = vmatpush.msra.mxu0 %v506
    %530 = vmatpush.msra.mxu0 %v505
    %531 = vmatpush.msra.mxu0 %v504
    %532 = vmatpush.msra.mxu0 %v503
    %533 = vmatpush.msra.mxu0 %v502
    %534 = vmatpush.msra.mxu0 %v501
    %535 = vmatpush.msra.mxu0 %v500
    %536 = vmatmul.f32.gmra.mxu0 %v499
    %v537 = vpop.f32.mrf.mxu0
    %v538 = vadd.f32 %v518, %v537
    %539 = vdwg.mxu0
    %540 = vst [vmem:[#allocation19] sm:$0xff] %v538
    %v541 = vld [vmem:[#allocation14] sm:$0xff]
    %v542 = vld [vmem:[#allocation14 + $0x8] sm:$0xff]
    %v543 = vld [vmem:[#allocation14 + $0x10] sm:$0xff]
    %v544 = vld [vmem:[#allocation14 + $0x18] sm:$0xff]
    %v545 = vld [vmem:[#allocation14 + $0x20] sm:$0xff]
    %v546 = vld [vmem:[#allocation14 + $0x28] sm:$0xff]
    %v547 = vld [vmem:[#allocation14 + $0x30] sm:$0xff]
    %v548 = vld [vmem:[#allocation14 + $0x38] sm:$0xff]
    %v549 = vld [vmem:[#allocation14 + $0x40] sm:$0xff]
    %v550 = vld [vmem:[#allocation14 + $0x48] sm:$0xff]
    %v551 = vld [vmem:[#allocation14 + $0x50] sm:$0xff]
    %v552 = vld [vmem:[#allocation14 + $0x58] sm:$0xff]
    %v553 = vld [vmem:[#allocation14 + $0x60] sm:$0xff]
    %v554 = vld [vmem:[#allocation14 + $0x68] sm:$0xff]
    %v555 = vld [vmem:[#allocation14 + $0x70] sm:$0xff]
    %v556 = vld [vmem:[#allocation14 + $0x78] sm:$0xff]
    %v557 = vld [vmem:[%s8] sm:$0x1]
    %v559 = vperm.slane %v557, 0
    %561 = vmatpush.msra.mxu0 %v556
    %562 = vmatpush.msra.mxu0 %v555
    %563 = vmatpush.msra.mxu0 %v554
    %564 = vmatpush.msra.mxu0 %v553
    %565 = vmatpush.msra.mxu0 %v552
    %566 = vmatpush.msra.mxu0 %v551
    %567 = vmatpush.msra.mxu0 %v550
    %568 = vmatpush.msra.mxu0 %v549
    %569 = vmatpush.msra.mxu0 %v548
    %570 = vmatpush.msra.mxu0 %v547
    %571 = vmatpush.msra.mxu0 %v546
    %572 = vmatpush.msra.mxu0 %v545
    %573 = vmatpush.msra.mxu0 %v544
    %574 = vmatpush.msra.mxu0 %v543
    %575 = vmatpush.msra.mxu0 %v542
    %576 = vmatpush.msra.mxu0 %v541
    %577 = vmatmul.f32.gmra.mxu0 %v538
    %v578 = vpop.f32.mrf.mxu0
    %v579 = vadd.f32 %v559, %v578
    %580 = vdwg.mxu0
    %v581 = vmax.f32 %v579, 0.0
    %v582 = vld [vmem:[#allocation16] sm:$0xff]
    %v583 = vld [vmem:[#allocation16 + $0x8] sm:$0xff]
    %v584 = vld [vmem:[#allocation16 + $0x10] sm:$0xff]
    %v585 = vld [vmem:[#allocation16 + $0x18] sm:$0xff]
    %v586 = vld [vmem:[#allocation16 + $0x20] sm:$0xff]
    %v587 = vld [vmem:[#allocation16 + $0x28] sm:$0xff]
    %v588 = vld [vmem:[#allocation16 + $0x30] sm:$0xff]
    %v589 = vld [vmem:[#allocation16 + $0x38] sm:$0xff]
    %v590 = vld [vmem:[#allocation16 + $0x40] sm:$0xff]
    %v591 = vld [vmem:[#allocation16 + $0x48] sm:$0xff]
    %v592 = vld [vmem:[#allocation16 + $0x50] sm:$0xff]
    %v593 = vld [vmem:[#allocation16 + $0x58] sm:$0xff]
    %v594 = vld [vmem:[#allocation16 + $0x60] sm:$0xff]
    %v595 = vld [vmem:[#allocation16 + $0x68] sm:$0xff]
    %v596 = vld [vmem:[#allocation16 + $0x70] sm:$0xff]
    %v597 = vld [vmem:[#allocation16 + $0x78] sm:$0xff]
    %v598 = vld [vmem:[#allocation16 + $0x80] sm:$0xff]
    %v599 = vld [vmem:[#allocation16 + $0x88] sm:$0xff]
    %v600 = vld [vmem:[#allocation16 + $0x90] sm:$0xff]
    %v601 = vld [vmem:[#allocation16 + $0x98] sm:$0xff]
    %v602 = vld [vmem:[#allocation16 + $0xa0] sm:$0xff]
    %v603 = vld [vmem:[#allocation16 + $0xa8] sm:$0xff]
    %v604 = vld [vmem:[#allocation16 + $0xb0] sm:$0xff]
    %v605 = vld [vmem:[#allocation16 + $0xb8] sm:$0xff]
    %v606 = vld [vmem:[#allocation16 + $0xc0] sm:$0xff]
    %v607 = vld [vmem:[#allocation16 + $0xc8] sm:$0xff]
    %v608 = vld [vmem:[#allocation16 + $0xd0] sm:$0xff]
    %v609 = vld [vmem:[#allocation16 + $0xd8] sm:$0xff]
    %v610 = vld [vmem:[#allocation16 + $0xe0] sm:$0xff]
    %v611 = vld [vmem:[#allocation16 + $0xe8] sm:$0xff]
    %v612 = vld [vmem:[#allocation16 + $0xf0] sm:$0xff]
    %v613 = vld [vmem:[#allocation16 + $0xf8] sm:$0xff]
    %v614 = vld [vmem:[%s10] sm:$0x3]
    %v616 = vperm.slane %v614, 0
    %v617 = vperm.slane %v614, 1
    %620 = vmatpush.msra.mxu0 %v612
    %621 = vmatpush.msra.mxu0 %v610
    %622 = vmatpush.msra.mxu0 %v608
    %623 = vmatpush.msra.mxu0 %v606
    %624 = vmatpush.msra.mxu0 %v604
    %625 = vmatpush.msra.mxu0 %v602
    %626 = vmatpush.msra.mxu0 %v600
    %627 = vmatpush.msra.mxu0 %v598
    %628 = vmatpush.msra.mxu0 %v596
    %629 = vmatpush.msra.mxu0 %v594
    %630 = vmatpush.msra.mxu0 %v592
    %631 = vmatpush.msra.mxu0 %v590
    %632 = vmatpush.msra.mxu0 %v588
    %633 = vmatpush.msra.mxu0 %v586
    %634 = vmatpush.msra.mxu0 %v584
    %635 = vmatpush.msra.mxu0 %v582
    %636 = vmatmul.f32.gmra.mxu0 %v581
    %v637 = vpop.f32.mrf.mxu0
    %v638 = vadd.f32 %v616, %v637
    %639 = vdwg.mxu0
    %640 = vmatpush.msra.mxu0 %v613
    %641 = vmatpush.msra.mxu0 %v611
    %642 = vmatpush.msra.mxu0 %v609
    %643 = vmatpush.msra.mxu0 %v607
    %644 = vmatpush.msra.mxu0 %v605
    %645 = vmatpush.msra.mxu0 %v603
    %646 = vmatpush.msra.mxu0 %v601
    %647 = vmatpush.msra.mxu0 %v599
    %648 = vmatpush.msra.mxu0 %v597
    %649 = vmatpush.msra.mxu0 %v595
    %650 = vmatpush.msra.mxu0 %v593
    %651 = vmatpush.msra.mxu0 %v591
    %652 = vmatpush.msra.mxu0 %v589
    %653 = vmatpush.msra.mxu0 %v587
    %654 = vmatpush.msra.mxu0 %v585
    %655 = vmatpush.msra.mxu0 %v583
    %656 = vmatmul.f32.gmra.mxu0 %v581
    %v657 = vpop.f32.mrf.mxu0
    %v658 = vadd.f32 %v617, %v657
    %659 = vdwg.mxu0
    %v660 = vmax.f32 %v638, 0.0
    %v661 = vmax.f32 %v658, 0.0
    %v662 = vld [vmem:[#allocation17] sm:$0xff]
    %v663 = vld [vmem:[#allocation17 + $0x8] sm:$0xff]
    %v664 = vld [vmem:[#allocation17 + $0x10] sm:$0xff]
    %v665 = vld [vmem:[#allocation17 + $0x18] sm:$0xff]
    %v666 = vld [vmem:[#allocation17 + $0x20] sm:$0xff]
    %v667 = vld [vmem:[#allocation17 + $0x28] sm:$0xff]
    %v668 = vld [vmem:[#allocation17 + $0x30] sm:$0xff]
    %v669 = vld [vmem:[#allocation17 + $0x38] sm:$0xff]
    %v670 = vld [vmem:[#allocation17 + $0x40] sm:$0xff]
    %v671 = vld [vmem:[#allocation17 + $0x48] sm:$0xff]
    %v672 = vld [vmem:[#allocation17 + $0x50] sm:$0xff]
    %v673 = vld [vmem:[#allocation17 + $0x58] sm:$0xff]
    %v674 = vld [vmem:[#allocation17 + $0x60] sm:$0xff]
    %v675 = vld [vmem:[#allocation17 + $0x68] sm:$0xff]
    %v676 = vld [vmem:[#allocation17 + $0x70] sm:$0xff]
    %v677 = vld [vmem:[#allocation17 + $0x78] sm:$0xff]
    %v678 = vld [vmem:[#allocation17 + $0x80] sm:$0xff]
    %v679 = vld [vmem:[#allocation17 + $0x88] sm:$0xff]
    %v680 = vld [vmem:[#allocation17 + $0x90] sm:$0xff]
    %v681 = vld [vmem:[#allocation17 + $0x98] sm:$0xff]
    %v682 = vld [vmem:[#allocation17 + $0xa0] sm:$0xff]
    %v683 = vld [vmem:[#allocation17 + $0xa8] sm:$0xff]
    %v684 = vld [vmem:[#allocation17 + $0xb0] sm:$0xff]
    %v685 = vld [vmem:[#allocation17 + $0xb8] sm:$0xff]
    %v686 = vld [vmem:[#allocation17 + $0xc0] sm:$0xff]
    %v687 = vld [vmem:[#allocation17 + $0xc8] sm:$0xff]
    %v688 = vld [vmem:[#allocation17 + $0xd0] sm:$0xff]
    %v689 = vld [vmem:[#allocation17 + $0xd8] sm:$0xff]
    %v690 = vld [vmem:[#allocation17 + $0xe0] sm:$0xff]
    %v691 = vld [vmem:[#allocation17 + $0xe8] sm:$0xff]
    %v692 = vld [vmem:[#allocation17 + $0xf0] sm:$0xff]
    %v693 = vld [vmem:[#allocation17 + $0xf8] sm:$0xff]
    %v694 = vld [vmem:[#allocation17 + $0x100] sm:$0xff]
    %v695 = vld [vmem:[#allocation17 + $0x108] sm:$0xff]
    %v696 = vld [vmem:[#allocation17 + $0x110] sm:$0xff]
    %v697 = vld [vmem:[#allocation17 + $0x118] sm:$0xff]
    %v698 = vld [vmem:[#allocation17 + $0x120] sm:$0xff]
    %v699 = vld [vmem:[#allocation17 + $0x128] sm:$0xff]
    %v700 = vld [vmem:[#allocation17 + $0x130] sm:$0xff]
    %v701 = vld [vmem:[#allocation17 + $0x138] sm:$0xff]
    %v702 = vld [vmem:[#allocation17 + $0x140] sm:$0xff]
    %v703 = vld [vmem:[#allocation17 + $0x148] sm:$0xff]
    %v704 = vld [vmem:[#allocation17 + $0x150] sm:$0xff]
    %v705 = vld [vmem:[#allocation17 + $0x158] sm:$0xff]
    %v706 = vld [vmem:[#allocation17 + $0x160] sm:$0xff]
    %v707 = vld [vmem:[#allocation17 + $0x168] sm:$0xff]
    %v708 = vld [vmem:[#allocation17 + $0x170] sm:$0xff]
    %v709 = vld [vmem:[#allocation17 + $0x178] sm:$0xff]
    %v710 = vld [vmem:[#allocation17 + $0x180] sm:$0xff]
    %v711 = vld [vmem:[#allocation17 + $0x188] sm:$0xff]
    %v712 = vld [vmem:[#allocation17 + $0x190] sm:$0xff]
    %v713 = vld [vmem:[#allocation17 + $0x198] sm:$0xff]
    %v714 = vld [vmem:[#allocation17 + $0x1a0] sm:$0xff]
    %v715 = vld [vmem:[#allocation17 + $0x1a8] sm:$0xff]
    %v716 = vld [vmem:[#allocation17 + $0x1b0] sm:$0xff]
    %v717 = vld [vmem:[#allocation17 + $0x1b8] sm:$0xff]
    %v718 = vld [vmem:[#allocation17 + $0x1c0] sm:$0xff]
    %v719 = vld [vmem:[#allocation17 + $0x1c8] sm:$0xff]
    %v720 = vld [vmem:[#allocation17 + $0x1d0] sm:$0xff]
    %v721 = vld [vmem:[#allocation17 + $0x1d8] sm:$0xff]
    %v722 = vld [vmem:[#allocation17 + $0x1e0] sm:$0xff]
    %v723 = vld [vmem:[#allocation17 + $0x1e8] sm:$0xff]
    %v724 = vld [vmem:[#allocation17 + $0x1f0] sm:$0xff]
    %v725 = vld [vmem:[#allocation17 + $0x1f8] sm:$0xff]
    %v726 = vld [vmem:[#allocation17 + $0x200] sm:$0xff]
    %v727 = vld [vmem:[#allocation17 + $0x208] sm:$0xff]
    %v728 = vld [vmem:[#allocation17 + $0x210] sm:$0xff]
    %v729 = vld [vmem:[#allocation17 + $0x218] sm:$0xff]
    %v730 = vld [vmem:[#allocation17 + $0x220] sm:$0xff]
    %v731 = vld [vmem:[#allocation17 + $0x228] sm:$0xff]
    %v732 = vld [vmem:[#allocation17 + $0x230] sm:$0xff]
    %v733 = vld [vmem:[#allocation17 + $0x238] sm:$0xff]
    %v734 = vld [vmem:[#allocation17 + $0x240] sm:$0xff]
    %v735 = vld [vmem:[#allocation17 + $0x248] sm:$0xff]
    %v736 = vld [vmem:[#allocation17 + $0x250] sm:$0xff]
    %v737 = vld [vmem:[#allocation17 + $0x258] sm:$0xff]
    %v738 = vld [vmem:[#allocation17 + $0x260] sm:$0xff]
    %v739 = vld [vmem:[#allocation17 + $0x268] sm:$0xff]
    %v740 = vld [vmem:[#allocation17 + $0x270] sm:$0xff]
    %v741 = vld [vmem:[#allocation17 + $0x278] sm:$0xff]
    %v742 = vld [vmem:[#allocation17 + $0x280] sm:$0xff]
    %v743 = vld [vmem:[#allocation17 + $0x288] sm:$0xff]
    %v744 = vld [vmem:[#allocation17 + $0x290] sm:$0xff]
    %v745 = vld [vmem:[#allocation17 + $0x298] sm:$0xff]
    %v746 = vld [vmem:[#allocation17 + $0x2a0] sm:$0xff]
    %v747 = vld [vmem:[#allocation17 + $0x2a8] sm:$0xff]
    %v748 = vld [vmem:[#allocation17 + $0x2b0] sm:$0xff]
    %v749 = vld [vmem:[#allocation17 + $0x2b8] sm:$0xff]
    %v750 = vld [vmem:[#allocation17 + $0x2c0] sm:$0xff]
    %v751 = vld [vmem:[#allocation17 + $0x2c8] sm:$0xff]
    %v752 = vld [vmem:[#allocation17 + $0x2d0] sm:$0xff]
    %v753 = vld [vmem:[#allocation17 + $0x2d8] sm:$0xff]
    %v754 = vld [vmem:[#allocation17 + $0x2e0] sm:$0xff]
    %v755 = vld [vmem:[#allocation17 + $0x2e8] sm:$0xff]
    %v756 = vld [vmem:[#allocation17 + $0x2f0] sm:$0xff]
    %v757 = vld [vmem:[#allocation17 + $0x2f8] sm:$0xff]
    %v758 = vld [vmem:[%s12] sm:$0x7]
    %v760 = vperm.slane %v758, 0
    %v761 = vperm.slane %v758, 1
    %v762 = vperm.slane %v758, 2
    %766 = vmatpush.msra.mxu0 %v707
    %767 = vmatpush.msra.mxu0 %v704
    %768 = vmatpush.msra.mxu0 %v701
    %769 = vmatpush.msra.mxu0 %v698
    %770 = vmatpush.msra.mxu0 %v695
    %771 = vmatpush.msra.mxu0 %v692
    %772 = vmatpush.msra.mxu0 %v689
    %773 = vmatpush.msra.mxu0 %v686
    %774 = vmatpush.msra.mxu0 %v683
    %775 = vmatpush.msra.mxu0 %v680
    %776 = vmatpush.msra.mxu0 %v677
    %777 = vmatpush.msra.mxu0 %v674
    %778 = vmatpush.msra.mxu0 %v671
    %779 = vmatpush.msra.mxu0 %v668
    %780 = vmatpush.msra.mxu0 %v665
    %781 = vmatpush.msra.mxu0 %v662
    %782 = vmatmul.f32.gmra.mxu0 %v660
    %v783 = vpop.f32.mrf.mxu0
    %v784 = vadd.f32 %v760, %v783
    %785 = vdwg.mxu0
    %786 = vmatpush.msra.mxu0 %v755
    %787 = vmatpush.msra.mxu0 %v752
    %788 = vmatpush.msra.mxu0 %v749
    %789 = vmatpush.msra.mxu0 %v746
    %790 = vmatpush.msra.mxu0 %v743
    %791 = vmatpush.msra.mxu0 %v740
    %792 = vmatpush.msra.mxu0 %v737
    %793 = vmatpush.msra.mxu0 %v734
    %794 = vmatpush.msra.mxu0 %v731
    %795 = vmatpush.msra.mxu0 %v728
    %796 = vmatpush.msra.mxu0 %v725
    %797 = vmatpush.msra.mxu0 %v722
    %798 = vmatpush.msra.mxu0 %v719
    %799 = vmatpush.msra.mxu0 %v716
    %800 = vmatpush.msra.mxu0 %v713
    %801 = vmatpush.msra.mxu0 %v710
    %802 = vmatmul.f32.gmra.mxu0 %v661
    %v803 = vpop.f32.mrf.mxu0
    %v804 = vadd.f32 %v784, %v803
    %805 = vdwg.mxu0
    %806 = vmatpush.msra.mxu0 %v708
    %807 = vmatpush.msra.mxu0 %v705
    %808 = vmatpush.msra.mxu0 %v702
    %809 = vmatpush.msra.mxu0 %v699
    %810 = vmatpush.msra.mxu0 %v696
    %811 = vmatpush.msra.mxu0 %v693
    %812 = vmatpush.msra.mxu0 %v690
    %813 = vmatpush.msra.mxu0 %v687
    %814 = vmatpush.msra.mxu0 %v684
    %815 = vmatpush.msra.mxu0 %v681
    %816 = vmatpush.msra.mxu0 %v678
    %817 = vmatpush.msra.mxu0 %v675
    %818 = vmatpush.msra.mxu0 %v672
    %819 = vmatpush.msra.mxu0 %v669
    %820 = vmatpush.msra.mxu0 %v666
    %821 = vmatpush.msra.mxu0 %v663
    %822 = vmatmul.f32.gmra.mxu0 %v660
    %v823 = vpop.f32.mrf.mxu0
    %v824 = vadd.f32 %v761, %v823
    %825 = vdwg.mxu0
    %826 = vmatpush.msra.mxu0 %v756
    %827 = vmatpush.msra.mxu0 %v753
    %828 = vmatpush.msra.mxu0 %v750
    %829 = vmatpush.msra.mxu0 %v747
    %830 = vmatpush.msra.mxu0 %v744
    %831 = vmatpush.msra.mxu0 %v741
    %832 = vmatpush.msra.mxu0 %v738
    %833 = vmatpush.msra.mxu0 %v735
    %834 = vmatpush.msra.mxu0 %v732
    %835 = vmatpush.msra.mxu0 %v729
    %836 = vmatpush.msra.mxu0 %v726
    %837 = vmatpush.msra.mxu0 %v723
    %838 = vmatpush.msra.mxu0 %v720
    %839 = vmatpush.msra.mxu0 %v717
    %840 = vmatpush.msra.mxu0 %v714
    %841 = vmatpush.msra.mxu0 %v711
    %842 = vmatmul.f32.gmra.mxu0 %v661
    %v843 = vpop.f32.mrf.mxu0
    %v844 = vadd.f32 %v824, %v843
    %845 = vdwg.mxu0
    %846 = vmatpush.msra.mxu0 %v709
    %847 = vmatpush.msra.mxu0 %v706
    %848 = vmatpush.msra.mxu0 %v703
    %849 = vmatpush.msra.mxu0 %v700
    %850 = vmatpush.msra.mxu0 %v697
    %851 = vmatpush.msra.mxu0 %v694
    %852 = vmatpush.msra.mxu0 %v691
    %853 = vmatpush.msra.mxu0 %v688
    %854 = vmatpush.msra.mxu0 %v685
    %855 = vmatpush.msra.mxu0 %v682
    %856 = vmatpush.msra.mxu0 %v679
    %857 = vmatpush.msra.mxu0 %v676
    %858 = vmatpush.msra.mxu0 %v673
    %859 = vmatpush.msra.mxu0 %v670
    %860 = vmatpush.msra.mxu0 %v667
    %861 = vmatpush.msra.mxu0 %v664
    %862 = vmatmul.f32.gmra.mxu0 %v660
    %v863 = vpop.f32.mrf.mxu0
    %v864 = vadd.f32 %v762, %v863
    %865 = vdwg.mxu0
    %866 = vmatpush.msra.mxu0 %v757
    %867 = vmatpush.msra.mxu0 %v754
    %868 = vmatpush.msra.mxu0 %v751
    %869 = vmatpush.msra.mxu0 %v748
    %870 = vmatpush.msra.mxu0 %v745
    %871 = vmatpush.msra.mxu0 %v742
    %872 = vmatpush.msra.mxu0 %v739
    %873 = vmatpush.msra.mxu0 %v736
    %874 = vmatpush.msra.mxu0 %v733
    %875 = vmatpush.msra.mxu0 %v730
    %876 = vmatpush.msra.mxu0 %v727
    %877 = vmatpush.msra.mxu0 %v724
    %878 = vmatpush.msra.mxu0 %v721
    %879 = vmatpush.msra.mxu0 %v718
    %880 = vmatpush.msra.mxu0 %v715
    %881 = vmatpush.msra.mxu0 %v712
    %882 = vmatmul.f32.gmra.mxu0 %v661
    %v883 = vpop.f32.mrf.mxu0
    %v884 = vadd.f32 %v864, %v883
    %885 = vdwg.mxu0
    %886 = vst [vmem:[#allocation20] sm:$0xff] %v804
    %887 = vst [vmem:[#allocation20 + $0x8] sm:$0xff] %v844
    %888 = vst [vmem:[#allocation20 + $0x10] sm:$0xff] %v884
    // Predicated region
    $region94: #{tpu_custom_call.1} parent=1 // pred_check
      _
    $region95: #{tpu_custom_call.1} parent=1 // pred_check_branch
      %890 = sbr.rel (0) target = $region97
    $region96: #{tpu_custom_call.1} parent=1 // pred_region
      %892 = vsyncadd [#allocation4], 0
      %s894 = sshll.u32 [#allocation19], 4
      %s895 = int_to_ptr.vmem [resolvable:$true] %s894
      %s896 = sshll.u32 %s13, 4
      %s897 = int_to_ptr.hbm [resolvable:$true] %s896
      %899 = dma.vmem_to_hbm [thread:$0]  %s895, 128, %s897, [#allocation4]
    $region97: #{tpu_custom_call.1} parent=1 // pred_fallthru
      _
    // Predicated region
    $region98: #{tpu_custom_call.1} parent=1 // pred_check
      _
    $region99: #{tpu_custom_call.1} parent=1 // pred_check_branch
      %901 = sbr.rel (0) target = $region101
    $region100: #{tpu_custom_call.1} parent=1 // pred_region
      %903 = vsyncadd [#allocation21], 0
      %s905 = sshll.u32 [#allocation20], 4
      %s906 = int_to_ptr.vmem [resolvable:$true] %s905
      %s907 = sshll.u32 %s14, 4
      %s908 = int_to_ptr.hbm [resolvable:$true] %s907
      %910 = dma.vmem_to_hbm [thread:$0]  %s906, 384, %s908, [#allocation21]
    $region101: #{tpu_custom_call.1} parent=1 // pred_fallthru
      _
    // Predicated region
    $region102: #{tpu_custom_call.1} parent=1 // pred_check
      _
    $region103: #{tpu_custom_call.1} parent=1 // pred_check_branch
      %912 = sbr.rel (0) target = $region105
    $region104: #{tpu_custom_call.1} parent=1 // pred_region
      %914 = dma.done [#allocation4], 128
    $region105: #{tpu_custom_call.1} parent=1 // pred_fallthru
      _
    // Predicated region
    $region106: #{tpu_custom_call.1} parent=1 // pred_check
      _
    $region107: #{tpu_custom_call.1} parent=1 // pred_check_branch
      %916 = sbr.rel (0) target = $region109
    $region108: #{tpu_custom_call.1} parent=1 // pred_region
      %918 = dma.done [#allocation21], 384
    $region109: #{tpu_custom_call.1} parent=1 // pred_fallthru
      _
    %919 = vsyncpa [#allocation3], 1
    %920 = vsyncpa [#allocation6], 1
    %921 = vsyncpa [#allocation9], 1
    %922 = vsyncpa [#allocation12], 1
    %923 = vsyncpa [#allocation15], 1
    %924 = vsyncpa [#allocation18], 1
    %925 = vsyncpa [#allocation4], 1
    %926 = vsyncpa [#allocation21], 1

</llo_original>
